<compile_context>
chip_gen: v7x
topology: tpu7x:2x2x1
jax: 0.10.0
libtpu: 0.0.40
codegen_flags: <defaults>
</compile_context>

<pallas_src>
import functools

import jax
import jax.numpy as jnp
from jax.experimental import pallas as pl
from jax.experimental.pallas import tpu as pltpu

LANE = 128  # TPU vreg lane width; hidden/action dims are padded to this.


def _round_up(x, m):
    return ((x + m - 1) // m) * m


def _cdiv(a, b):
    return -(-a // b)


def make_mlp_kernel(n_layers, compute_dtype):
    """Kernel over one (bt, obs_k) input block and one (bt, 128) output block,
    with a VMEM-resident parameter slab of shape
    (n_layers*128 + round_up(n_layers, 8), 128)."""
    bias_base = n_layers * LANE
    bias_rows = _round_up(n_layers, 8)

    def kernel(x_ref, p_ref, o_ref):
        h = x_ref[...]                               # (bt, obs_k), compute_dtype
        k0 = x_ref.shape[-1]                         # static, multiple of 8
        # One load for the whole (8-row aligned) bias block; rows picked in-vreg.
        biases = p_ref[bias_base:bias_base + bias_rows, :].astype(jnp.float32)
        for l in range(n_layers):                    # statically unrolled (small)
            k_l = k0 if l == 0 else LANE
            w = p_ref[l * LANE:l * LANE + k_l, :]    # (k_l, 128)
            h = jnp.dot(h, w, preferred_element_type=jnp.float32)   # MXU, f32 acc
            h = h + biases[l:l + 1, :]               # f32 VPU (v5e has no bf16 VPU)
            if l < n_layers - 1:
                h = jnp.maximum(h, 0.0).astype(compute_dtype)       # ReLU
        o_ref[...] = h.astype(o_ref.dtype)           # lane-dense store, compute dtype

    return kernel


def pack_params(params, compute_dtype=jnp.bfloat16):
    """Pack [(W, b)] (W: (in, out), b: (out,)) into one lane-dense slab.

    rows [l*128, (l+1)*128) : W_l zero-padded to (128, 128)
    row  n_layers*128 + l   : b_l zero-padded to (128,)   (8-row aligned block)

    NOTE: with the bf16 default this quantizes the stored weights/biases (and
    the input in mlp_forward) to bf16 -- weight quantization, fine for a policy
    MLP; pass jnp.float32 for an exact path.
    """
    n_layers = len(params)
    rows = n_layers * LANE + _round_up(n_layers, 8)
    slab = jnp.zeros((rows, LANE), compute_dtype)
    for l, (w, b) in enumerate(params):
        in_dim, out_dim = w.shape
        assert in_dim <= LANE and out_dim <= LANE, (
            "single-slab kernel assumes every layer dim <= 128")
        # TODO(synk): tile K/N inside the kernel if any layer dim ever exceeds 128.
        slab = slab.at[l * LANE:l * LANE + in_dim, :out_dim].set(
            w.astype(compute_dtype))
        slab = slab.at[n_layers * LANE + l, :out_dim].set(
            b.reshape(-1).astype(compute_dtype))
    return slab


@functools.partial(
    jax.jit, static_argnames=("n_layers", "actions_dim", "batch_tile"))
def mlp_forward(x, packed, *, n_layers, actions_dim, batch_tile=1024):
    batch, obs_dim = x.shape
    assert obs_dim <= LANE
    compute_dtype = packed.dtype

    # Balanced batch tiles (multiple of 8 sublanes).  Prefer an even number of
    # grid steps when splitting so v7x's two TensorCores shard evenly under
    # dimension_semantics=("parallel",).
    n_steps = _cdiv(batch, batch_tile)
    if n_steps > 1 and n_steps % 2 == 1:
        n_steps += 1
    bt = _round_up(_cdiv(batch, n_steps), 8)
    b_pad = n_steps * bt

    # Pad ONLY the batch axis (and obs -> sublane multiple): no 128-lane
    # inflation of the input in HBM.
    obs_k = _round_up(obs_dim, 8)
    x_pad = jnp.pad(x.astype(compute_dtype),
                    ((0, b_pad - batch), (0, obs_k - obs_dim)))

    itemsize = jnp.dtype(compute_dtype).itemsize
    cost = pl.CostEstimate(
        flops=2 * n_layers * b_pad * LANE * LANE,
        transcendentals=0,
        bytes_accessed=(b_pad * obs_k + packed.size + b_pad * LANE) * itemsize,
    )

    out = pl.pallas_call(
        make_mlp_kernel(n_layers, compute_dtype),
        out_shape=jax.ShapeDtypeStruct((b_pad, LANE), compute_dtype),
        grid_spec=pltpu.PrefetchScalarGridSpec(
            num_scalar_prefetch=0,
            grid=(n_steps,),
            in_specs=[
                pl.BlockSpec((bt, obs_k), lambda i: (i, 0)),    # x batch tile
                pl.BlockSpec(packed.shape, lambda i: (0, 0)),   # resident param slab
                # NOTE: slab could use pipeline_mode=pl.Buffered(1) / a scratch
                # copy to drop its duplicate pipeline buffer; negligible here.
            ],
            out_specs=pl.BlockSpec((bt, LANE), lambda i: (i, 0)),
        ),
        compiler_params=pltpu.CompilerParams(
            dimension_semantics=("parallel",)),  # megacore sharding on v7x
        cost_estimate=cost,
    )(x_pad, packed)

    # Tiny slice + f32 cast in the wrapper; kernel DMA stays in compute dtype.
    return out[:batch, :actions_dim].astype(jnp.float32)


# ----------------------------- reference / demo -----------------------------

def init_linear(key, in_dim, out_dim):
    # Mimic PyTorch's default U(-1/sqrt(in), 1/sqrt(in)).
    kw, kb = jax.random.split(key)
    bound = 1.0 / jnp.sqrt(jnp.float32(in_dim))
    w = jax.random.uniform(kw, (in_dim, out_dim), jnp.float32, -bound, bound)
    b = jax.random.uniform(kb, (out_dim,), jnp.float32, -bound, bound)
    return w, b


def make_mlp_params(key, observation_dim, actions_dim, sizes):
    dims = [observation_dim] + list(sizes) + [actions_dim]
    params = []
    for i in range(len(dims) - 1):
        key, sub = jax.random.split(key)
        params.append(init_linear(sub, dims[i], dims[i + 1]))
    return params


def mlp_reference(x, params):
    h = x
    for i, (w, b) in enumerate(params):
        h = h @ w + b
        if i < len(params) - 1:
            h = jnp.maximum(h, 0.0)
    return h


if __name__ == "__main__":
    # LunarLander-like dims: obs=8, actions=4, hidden sizes [32, 32].
    observation_dim, actions_dim, sizes = 8, 4, [32, 32]

    key = jax.random.PRNGKey(0)
    key, pkey, xkey, xkey2 = jax.random.split(key, 4)
    params = make_mlp_params(pkey, observation_dim, actions_dim, sizes)
    n_layers = len(params)

    # --- small batch (B=2), exact f32 path ----------------------------------
    x = jax.random.normal(xkey, (2, observation_dim), jnp.float32)
    packed_f32 = pack_params(params, jnp.float32)
    out = jax.block_until_ready(
        mlp_forward(x, packed_f32, n_layers=n_layers, actions_dim=actions_dim))
    ref = mlp_reference(x, params)
    assert out.shape == (2, actions_dim)
    assert jnp.allclose(out, ref, atol=1e-5, rtol=1e-5), "f32 mismatch vs reference"

    # --- larger batch (B=300), default bf16 packing/compute path -------------
    xb = jax.random.normal(xkey2, (300, observation_dim), jnp.float32)
    packed_bf16 = pack_params(params)  # bf16 default (weight quantization)
    out_bf16 = jax.block_until_ready(
        mlp_forward(xb, packed_bf16, n_layers=n_layers, actions_dim=actions_dim))
    ref_b = mlp_reference(xb, params)
    assert out_bf16.shape == (300, actions_dim)
    assert jnp.allclose(out_bf16, ref_b, atol=5e-2, rtol=5e-2), "bf16 mismatch vs reference"

    # --- same batch in f32 with a small tile: exercises multi-step grid ------
    out_b32 = jax.block_until_ready(
        mlp_forward(xb, packed_f32, n_layers=n_layers, actions_dim=actions_dim,
                    batch_tile=128))
    assert jnp.allclose(out_b32, ref_b, atol=1e-5, rtol=1e-5), "f32 batched mismatch"

    print("KERNEL_OK")
</pallas_src>

<mosaic_0001>
module attributes {stable_mosaic.version = 11 : i64} {
  func.func @kernel(%arg0: i32, %arg1: memref<8x8xf32, #tpu.memory_space<vmem>>, %arg2: memref<392x128xf32, #tpu.memory_space<vmem>>, %arg3: memref<8x128xf32, #tpu.memory_space<vmem>>) attributes {dimension_semantics = [#tpu.dimension_semantics<parallel>], iteration_bounds = array<i64: 1>, scalar_prefetch = 0 : i64, scratch_operands = 0 : i64, tpu.core_type = #tpu.core_type<tc>, window_params = [{transform_indices = @transform_0, window_bounds = array<i64: 8, 8>}, {pipeline_mode = #tpu.pipeline_mode<synchronous>, transform_indices = @transform_1, window_bounds = array<i64: 392, 128>}, {transform_indices = @transform_2, window_bounds = array<i64: 8, 128>}]} {
    %c0 = arith.constant 0 : index
    %c0_0 = arith.constant 0 : index
    %0 = vector.load %arg1[%c0, %c0_0] : memref<8x8xf32, #tpu.memory_space<vmem>>, vector<8x8xf32>
    %c384 = arith.constant 384 : index
    %c0_1 = arith.constant 0 : index
    %1 = vector.load %arg2[%c384, %c0_1] : memref<392x128xf32, #tpu.memory_space<vmem>>, vector<8x128xf32>
    %c0_2 = arith.constant 0 : index
    %c0_3 = arith.constant 0 : index
    %2 = vector.load %arg2[%c0_2, %c0_3] : memref<392x128xf32, #tpu.memory_space<vmem>>, vector<8x128xf32>
    %cst = arith.constant dense<0.000000e+00> : vector<8x128xf32>
    %3 = tpu.matmul %0, %2, %cst {dimension_numbers = #tpu.dot_dimension_numbers<[1], [0], [0], [1], [0, 0, 1, 1], [], []>} : vector<8x8xf32>, vector<8x128xf32>, vector<8x128xf32> -> vector<8x128xf32>
    %4 = vector.extract_strided_slice %1 {offsets = [0, 0], sizes = [1, 128], strides = [1, 1]} : vector<8x128xf32> to vector<1x128xf32>
    %5 = vector.broadcast %4 : vector<1x128xf32> to vector<8x128xf32>
    %6 = arith.addf %3, %5 : vector<8x128xf32>
    %cst_4 = arith.constant 0.000000e+00 : f32
    %7 = vector.broadcast %cst_4 : f32 to vector<8x128xf32>
    %8 = arith.maximumf %6, %7 : vector<8x128xf32>
    %c128 = arith.constant 128 : index
    %c0_5 = arith.constant 0 : index
    %9 = vector.load %arg2[%c128, %c0_5] : memref<392x128xf32, #tpu.memory_space<vmem>>, vector<128x128xf32>
    %cst_6 = arith.constant dense<0.000000e+00> : vector<8x128xf32>
    %10 = tpu.matmul %8, %9, %cst_6 {dimension_numbers = #tpu.dot_dimension_numbers<[1], [0], [0], [1], [0, 0, 1, 1], [], []>} : vector<8x128xf32>, vector<128x128xf32>, vector<8x128xf32> -> vector<8x128xf32>
    %11 = vector.extract_strided_slice %1 {offsets = [1, 0], sizes = [1, 128], strides = [1, 1]} : vector<8x128xf32> to vector<1x128xf32>
    %12 = vector.broadcast %11 : vector<1x128xf32> to vector<8x128xf32>
    %13 = arith.addf %10, %12 : vector<8x128xf32>
    %cst_7 = arith.constant 0.000000e+00 : f32
    %14 = vector.broadcast %cst_7 : f32 to vector<8x128xf32>
    %15 = arith.maximumf %13, %14 : vector<8x128xf32>
    %c256 = arith.constant 256 : index
    %c0_8 = arith.constant 0 : index
    %16 = vector.load %arg2[%c256, %c0_8] : memref<392x128xf32, #tpu.memory_space<vmem>>, vector<128x128xf32>
    %cst_9 = arith.constant dense<0.000000e+00> : vector<8x128xf32>
    %17 = tpu.matmul %15, %16, %cst_9 {dimension_numbers = #tpu.dot_dimension_numbers<[1], [0], [0], [1], [0, 0, 1, 1], [], []>} : vector<8x128xf32>, vector<128x128xf32>, vector<8x128xf32> -> vector<8x128xf32>
    %18 = vector.extract_strided_slice %1 {offsets = [2, 0], sizes = [1, 128], strides = [1, 1]} : vector<8x128xf32> to vector<1x128xf32>
    %19 = vector.broadcast %18 : vector<1x128xf32> to vector<8x128xf32>
    %20 = arith.addf %17, %19 : vector<8x128xf32>
    %c0_10 = arith.constant 0 : index
    %c0_11 = arith.constant 0 : index
    %21 = vector.load %arg3[%c0_10, %c0_11] : memref<8x128xf32, #tpu.memory_space<vmem>>, vector<8x128xf32>
    tpu.vector_store %arg3[%c0_10, %c0_11], %20 {strides = array<i32>} : memref<8x128xf32, #tpu.memory_space<vmem>>, vector<8x128xf32>,
    return
  }
  func.func @transform_0(%arg0: i32) -> (i32, i32) {
    %c0_i32 = arith.constant 0 : i32
    %c0_i32_0 = arith.constant 0 : i32
    return %arg0, %c0_i32 : i32, i32
  }
  func.func @transform_1(%arg0: i32) -> (i32, i32) {
    %c0_i32 = arith.constant 0 : i32
    %c0_i32_0 = arith.constant 0 : i32
    %c0_i32_1 = arith.constant 0 : i32
    return %c0_i32, %c0_i32_0 : i32, i32
  }
  func.func @transform_2(%arg0: i32) -> (i32, i32) {
    %c0_i32 = arith.constant 0 : i32
    %c0_i32_0 = arith.constant 0 : i32
    return %arg0, %c0_i32 : i32, i32
  }
}

</mosaic_0001>

<llo_original>
// kernel: mlp_forward.1
$region0: #{mlp_forward.1}
  #allocation0 [shape = 'u32[]', space=smem, size = 0x4, offset = 0x4, fixed_abs, tag = 'smem constant byte address 0x4 - core index']
  #allocation1 [shape = 'u32[144,128]{1,0:T(1,128)}', space=vmem, size = 0x12000, scoped, tag = 'internal scratch']
  %s0 = inlined_call_operand.vmem [shape: f32[8,8], index: 0, kind: input, shape index: {}]
  %s1 = inlined_call_operand.hbm [shape: f32[392,128], index: 1, kind: input, shape index: {}]
  %s2 = inlined_call_operand.vmem [shape: f32[8,128], index: 2, kind: output, shape index: {}]
  %s3 = sld [smem:[#allocation0]]
  $region22: #{mlp_forward.1} parent=0
    _
  %s5 = ssub.s32 1, %s3
  %s6 = scalar_select 0, %s5, %s3
  $region1: #{mlp_forward.1} parent=0
    #allocation2 [shape = 'u8[200704]{0}', space=vmem, size = 0x31000, scoped, tag = 'input window, operand 1, single buffered']
    #allocation3 [shape = 's32[1]{0}', space=sflag, size = 0x4, scoped, tag = 'scoped memory for mlp_forward.1']
    %7 = vsyncpa [#allocation3], 0
    // Predicated region
    $region2: #{mlp_forward.1} parent=1 // pred_check
      _
    $region3: #{mlp_forward.1} parent=1 // pred_check_branch
      %9 = sbr.rel (0) target = $region5
    $region4: #{mlp_forward.1} parent=1 // pred_region
      _
    $region5: #{mlp_forward.1} parent=1 // pred_fallthru
      _
    // Predicated region
    $region6: #{mlp_forward.1} parent=1 // pred_check
      _
    $region7: #{mlp_forward.1} parent=1 // pred_check_branch
      %11 = sbr.rel (0) target = $region9
    $region8: #{mlp_forward.1} parent=1 // pred_region
      %s13 = ssub.s32 6272, 6272
      %14 = vsyncadd [#allocation3], %s13
      %s15 = sshll.u32 [#allocation2], 4
      %s16 = int_to_ptr.vmem [resolvable:$true] %s15
      %21 = dma.hbm_to_vmem [thread:$0]  %s1, 6272, %s16, [#allocation3], 128, 128, 8
    $region9: #{mlp_forward.1} parent=1 // pred_fallthru
      _
    // Predicated region
    $region10: #{mlp_forward.1} parent=1 // pred_check
      _
    $region11: #{mlp_forward.1} parent=1 // pred_check_branch
      %23 = sbr.rel (0) target = $region13
    $region12: #{mlp_forward.1} parent=1 // pred_region
      %24 = dma.done [#allocation3], 6272
    $region13: #{mlp_forward.1} parent=1 // pred_fallthru
      _
    %v25 = vld [vmem:[%s0] sm:$0xff]
    %v26 = vld [vmem:[#allocation2 + $0x180] sm:$0xff]
    %v27 = vld [vmem:[#allocation2] sm:$0xff]
    %v28 = vlaneseq
    %v29 = vshrl.u32 %v28, 7
    %v30 = vsub.s32 0, %v29
    %v31 = vrot.slane %v26, %v30
    %vm32 = vcmask 64512
    %v34 = vsel %vm32, %v25, 0
    %36 = vmatprep.subr.mxu0 0.0
    %37 = vmatpush1.msra.mxu0 %v27
    %38 = vmatprep.subr.mxu0 0.0
    %39 = vmatpush1.msra.mxu0 0.0
    %40 = vmatprep.subr.mxu0 0.0
    %41 = vmatpush1.msra.mxu0 0.0
    %42 = vmatprep.subr.mxu0 0.0
    %43 = vmatpush1.msra.mxu0 0.0
    %44 = vmatprep.subr.mxu0 0.0
    %45 = vmatpush1.msra.mxu0 0.0
    %46 = vmatprep.subr.mxu0 0.0
    %47 = vmatpush1.msra.mxu0 0.0
    %48 = vmatprep.subr.mxu0 0.0
    %49 = vmatpush1.msra.mxu0 0.0
    %50 = vmatprep.subr.mxu0 0.0
    %51 = vmatpush1.msra.mxu0 0.0
    %52 = vmatprep.subr.mxu0 0.0
    %53 = vmatpush1.msra.mxu0 0.0
    %54 = vmatprep.subr.mxu0 0.0
    %55 = vmatpush1.msra.mxu0 0.0
    %56 = vmatprep.subr.mxu0 0.0
    %57 = vmatpush1.msra.mxu0 0.0
    %58 = vmatprep.subr.mxu0 0.0
    %59 = vmatpush1.msra.mxu0 0.0
    %60 = vmatprep.subr.mxu0 0.0
    %61 = vmatpush1.msra.mxu0 0.0
    %62 = vmatprep.subr.mxu0 0.0
    %63 = vmatpush1.msra.mxu0 0.0
    %64 = vmatprep.subr.mxu0 0.0
    %65 = vmatpush1.msra.mxu0 0.0
    %66 = vmatprep.subr.mxu0 0.0
    %67 = vmatpush1.msra.mxu0 0.0
    %68 = vmatprep.subr.mxu0 0.0
    %69 = vmatpush1.msra.mxu0 0.0
    %70 = vmatprep.subr.mxu0 0.0
    %71 = vmatpush1.msra.mxu0 0.0
    %72 = vmatprep.subr.mxu0 0.0
    %73 = vmatpush1.msra.mxu0 0.0
    %74 = vmatprep.subr.mxu0 0.0
    %75 = vmatpush1.msra.mxu0 0.0
    %76 = vmatprep.subr.mxu0 0.0
    %77 = vmatpush1.msra.mxu0 0.0
    %78 = vmatprep.subr.mxu0 0.0
    %79 = vmatpush1.msra.mxu0 0.0
    %80 = vmatprep.subr.mxu0 0.0
    %81 = vmatpush1.msra.mxu0 0.0
    %82 = vmatprep.subr.mxu0 0.0
    %83 = vmatpush1.msra.mxu0 0.0
    %84 = vmatprep.subr.mxu0 0.0
    %85 = vmatpush1.msra.mxu0 0.0
    %86 = vmatprep.subr.mxu0 0.0
    %87 = vmatpush1.msra.mxu0 0.0
    %88 = vmatprep.subr.mxu0 0.0
    %89 = vmatpush1.msra.mxu0 0.0
    %90 = vmatprep.subr.mxu0 0.0
    %91 = vmatpush1.msra.mxu0 0.0
    %92 = vmatprep.subr.mxu0 0.0
    %93 = vmatpush1.msra.mxu0 0.0
    %94 = vmatprep.subr.mxu0 0.0
    %95 = vmatpush1.msra.mxu0 0.0
    %96 = vmatprep.subr.mxu0 0.0
    %97 = vmatpush1.msra.mxu0 0.0
    %98 = vmatprep.subr.mxu0 0.0
    %99 = vmatpush1.msra.mxu0 0.0
    %100 = vmatprep.mubr.f32.mxu0 0.0
    %101 = vmatmul.mubr.f32.gmra.mrb[0].mxu0 %v34
    %v102 = vpop.f32.mrb[0].mxu0
    %v103 = vadd.f32 %v31, %v102
    %v104 = vpop.f32.mrb[0].mxu0
    %105 = vdwg.mxu0
    %v106 = vmax.f32 %v103, 0.0
    %v107 = vld [vmem:[#allocation2 + $0x80] sm:$0xff]
    %v108 = vld [vmem:[#allocation2 + $0x88] sm:$0xff]
    %v109 = vld [vmem:[#allocation2 + $0x90] sm:$0xff]
    %v110 = vld [vmem:[#allocation2 + $0x98] sm:$0xff]
    %v111 = vld [vmem:[#allocation2 + $0xa0] sm:$0xff]
    %v112 = vld [vmem:[#allocation2 + $0xa8] sm:$0xff]
    %v113 = vld [vmem:[#allocation2 + $0xb0] sm:$0xff]
    %v114 = vld [vmem:[#allocation2 + $0xb8] sm:$0xff]
    %v115 = vld [vmem:[#allocation2 + $0xc0] sm:$0xff]
    %v116 = vld [vmem:[#allocation2 + $0xc8] sm:$0xff]
    %v117 = vld [vmem:[#allocation2 + $0xd0] sm:$0xff]
    %v118 = vld [vmem:[#allocation2 + $0xd8] sm:$0xff]
    %v119 = vld [vmem:[#allocation2 + $0xe0] sm:$0xff]
    %v120 = vld [vmem:[#allocation2 + $0xe8] sm:$0xff]
    %v121 = vld [vmem:[#allocation2 + $0xf0] sm:$0xff]
    %v122 = vld [vmem:[#allocation2 + $0xf8] sm:$0xff]
    %v123 = vlaneseq
    %v124 = vshrl.u32 %v123, 7
    %v125 = vsub.s32 1, %v124
    %v126 = vrot.slane %v26, %v125
    %127 = vmatprep.subr.mxu0 0.0
    %128 = vmatpush1.msra.mxu0 %v107
    %129 = vmatprep.subr.mxu0 0.0
    %130 = vmatpush1.msra.mxu0 %v108
    %131 = vmatprep.subr.mxu0 0.0
    %132 = vmatpush1.msra.mxu0 %v109
    %133 = vmatprep.subr.mxu0 0.0
    %134 = vmatpush1.msra.mxu0 %v110
    %135 = vmatprep.subr.mxu0 0.0
    %136 = vmatpush1.msra.mxu0 %v111
    %137 = vmatprep.subr.mxu0 0.0
    %138 = vmatpush1.msra.mxu0 %v112
    %139 = vmatprep.subr.mxu0 0.0
    %140 = vmatpush1.msra.mxu0 %v113
    %141 = vmatprep.subr.mxu0 0.0
    %142 = vmatpush1.msra.mxu0 %v114
    %143 = vmatprep.subr.mxu0 0.0
    %144 = vmatpush1.msra.mxu0 %v115
    %145 = vmatprep.subr.mxu0 0.0
    %146 = vmatpush1.msra.mxu0 %v116
    %147 = vmatprep.subr.mxu0 0.0
    %148 = vmatpush1.msra.mxu0 %v117
    %149 = vmatprep.subr.mxu0 0.0
    %150 = vmatpush1.msra.mxu0 %v118
    %151 = vmatprep.subr.mxu0 0.0
    %152 = vmatpush1.msra.mxu0 %v119
    %153 = vmatprep.subr.mxu0 0.0
    %154 = vmatpush1.msra.mxu0 %v120
    %155 = vmatprep.subr.mxu0 0.0
    %156 = vmatpush1.msra.mxu0 %v121
    %157 = vmatprep.subr.mxu0 0.0
    %158 = vmatpush1.msra.mxu0 %v122
    %159 = vmatprep.subr.mxu0 0.0
    %160 = vmatpush1.msra.mxu0 0.0
    %161 = vmatprep.subr.mxu0 0.0
    %162 = vmatpush1.msra.mxu0 0.0
    %163 = vmatprep.subr.mxu0 0.0
    %164 = vmatpush1.msra.mxu0 0.0
    %165 = vmatprep.subr.mxu0 0.0
    %166 = vmatpush1.msra.mxu0 0.0
    %167 = vmatprep.subr.mxu0 0.0
    %168 = vmatpush1.msra.mxu0 0.0
    %169 = vmatprep.subr.mxu0 0.0
    %170 = vmatpush1.msra.mxu0 0.0
    %171 = vmatprep.subr.mxu0 0.0
    %172 = vmatpush1.msra.mxu0 0.0
    %173 = vmatprep.subr.mxu0 0.0
    %174 = vmatpush1.msra.mxu0 0.0
    %175 = vmatprep.subr.mxu0 0.0
    %176 = vmatpush1.msra.mxu0 0.0
    %177 = vmatprep.subr.mxu0 0.0
    %178 = vmatpush1.msra.mxu0 0.0
    %179 = vmatprep.subr.mxu0 0.0
    %180 = vmatpush1.msra.mxu0 0.0
    %181 = vmatprep.subr.mxu0 0.0
    %182 = vmatpush1.msra.mxu0 0.0
    %183 = vmatprep.subr.mxu0 0.0
    %184 = vmatpush1.msra.mxu0 0.0
    %185 = vmatprep.subr.mxu0 0.0
    %186 = vmatpush1.msra.mxu0 0.0
    %187 = vmatprep.subr.mxu0 0.0
    %188 = vmatpush1.msra.mxu0 0.0
    %189 = vmatprep.subr.mxu0 0.0
    %190 = vmatpush1.msra.mxu0 0.0
    %191 = vmatprep.mubr.f32.mxu0 0.0
    %192 = vmatmul.mubr.f32.gmra.mrb[0].mxu0 %v106
    %v193 = vpop.f32.mrb[0].mxu0
    %v194 = vadd.f32 %v126, %v193
    %v195 = vpop.f32.mrb[0].mxu0
    %196 = vdwg.mxu0
    %v197 = vmax.f32 %v194, 0.0
    %v198 = vld [vmem:[#allocation2 + $0x100] sm:$0xff]
    %v199 = vld [vmem:[#allocation2 + $0x108] sm:$0xff]
    %v200 = vld [vmem:[#allocation2 + $0x110] sm:$0xff]
    %v201 = vld [vmem:[#allocation2 + $0x118] sm:$0xff]
    %v202 = vld [vmem:[#allocation2 + $0x120] sm:$0xff]
    %v203 = vld [vmem:[#allocation2 + $0x128] sm:$0xff]
    %v204 = vld [vmem:[#allocation2 + $0x130] sm:$0xff]
    %v205 = vld [vmem:[#allocation2 + $0x138] sm:$0xff]
    %v206 = vld [vmem:[#allocation2 + $0x140] sm:$0xff]
    %v207 = vld [vmem:[#allocation2 + $0x148] sm:$0xff]
    %v208 = vld [vmem:[#allocation2 + $0x150] sm:$0xff]
    %v209 = vld [vmem:[#allocation2 + $0x158] sm:$0xff]
    %v210 = vld [vmem:[#allocation2 + $0x160] sm:$0xff]
    %v211 = vld [vmem:[#allocation2 + $0x168] sm:$0xff]
    %v212 = vld [vmem:[#allocation2 + $0x170] sm:$0xff]
    %v213 = vld [vmem:[#allocation2 + $0x178] sm:$0xff]
    %v214 = vlaneseq
    %v215 = vshrl.u32 %v214, 7
    %v216 = vsub.s32 2, %v215
    %v217 = vrot.slane %v26, %v216
    %218 = vmatprep.subr.mxu0 0.0
    %219 = vmatpush1.msra.mxu0 %v198
    %220 = vmatprep.subr.mxu0 0.0
    %221 = vmatpush1.msra.mxu0 %v199
    %222 = vmatprep.subr.mxu0 0.0
    %223 = vmatpush1.msra.mxu0 %v200
    %224 = vmatprep.subr.mxu0 0.0
    %225 = vmatpush1.msra.mxu0 %v201
    %226 = vmatprep.subr.mxu0 0.0
    %227 = vmatpush1.msra.mxu0 %v202
    %228 = vmatprep.subr.mxu0 0.0
    %229 = vmatpush1.msra.mxu0 %v203
    %230 = vmatprep.subr.mxu0 0.0
    %231 = vmatpush1.msra.mxu0 %v204
    %232 = vmatprep.subr.mxu0 0.0
    %233 = vmatpush1.msra.mxu0 %v205
    %234 = vmatprep.subr.mxu0 0.0
    %235 = vmatpush1.msra.mxu0 %v206
    %236 = vmatprep.subr.mxu0 0.0
    %237 = vmatpush1.msra.mxu0 %v207
    %238 = vmatprep.subr.mxu0 0.0
    %239 = vmatpush1.msra.mxu0 %v208
    %240 = vmatprep.subr.mxu0 0.0
    %241 = vmatpush1.msra.mxu0 %v209
    %242 = vmatprep.subr.mxu0 0.0
    %243 = vmatpush1.msra.mxu0 %v210
    %244 = vmatprep.subr.mxu0 0.0
    %245 = vmatpush1.msra.mxu0 %v211
    %246 = vmatprep.subr.mxu0 0.0
    %247 = vmatpush1.msra.mxu0 %v212
    %248 = vmatprep.subr.mxu0 0.0
    %249 = vmatpush1.msra.mxu0 %v213
    %250 = vmatprep.subr.mxu0 0.0
    %251 = vmatpush1.msra.mxu0 0.0
    %252 = vmatprep.subr.mxu0 0.0
    %253 = vmatpush1.msra.mxu0 0.0
    %254 = vmatprep.subr.mxu0 0.0
    %255 = vmatpush1.msra.mxu0 0.0
    %256 = vmatprep.subr.mxu0 0.0
    %257 = vmatpush1.msra.mxu0 0.0
    %258 = vmatprep.subr.mxu0 0.0
    %259 = vmatpush1.msra.mxu0 0.0
    %260 = vmatprep.subr.mxu0 0.0
    %261 = vmatpush1.msra.mxu0 0.0
    %262 = vmatprep.subr.mxu0 0.0
    %263 = vmatpush1.msra.mxu0 0.0
    %264 = vmatprep.subr.mxu0 0.0
    %265 = vmatpush1.msra.mxu0 0.0
    %266 = vmatprep.subr.mxu0 0.0
    %267 = vmatpush1.msra.mxu0 0.0
    %268 = vmatprep.subr.mxu0 0.0
    %269 = vmatpush1.msra.mxu0 0.0
    %270 = vmatprep.subr.mxu0 0.0
    %271 = vmatpush1.msra.mxu0 0.0
    %272 = vmatprep.subr.mxu0 0.0
    %273 = vmatpush1.msra.mxu0 0.0
    %274 = vmatprep.subr.mxu0 0.0
    %275 = vmatpush1.msra.mxu0 0.0
    %276 = vmatprep.subr.mxu0 0.0
    %277 = vmatpush1.msra.mxu0 0.0
    %278 = vmatprep.subr.mxu0 0.0
    %279 = vmatpush1.msra.mxu0 0.0
    %280 = vmatprep.subr.mxu0 0.0
    %281 = vmatpush1.msra.mxu0 0.0
    %282 = vmatprep.mubr.f32.mxu0 0.0
    %283 = vmatmul.mubr.f32.gmra.mrb[0].mxu0 %v197
    %v284 = vpop.f32.mrb[0].mxu0
    %v285 = vadd.f32 %v217, %v284
    %v286 = vpop.f32.mrb[0].mxu0
    %287 = vdwg.mxu0
    %288 = vst [vmem:[%s2] sm:$0xff] %v285
    // Predicated region
    $region14: #{mlp_forward.1} parent=1 // pred_check
      _
    $region15: #{mlp_forward.1} parent=1 // pred_check_branch
      %290 = sbr.rel (0) target = $region17
    $region16: #{mlp_forward.1} parent=1 // pred_region
      _
    $region17: #{mlp_forward.1} parent=1 // pred_fallthru
      _
    // Predicated region
    $region18: #{mlp_forward.1} parent=1 // pred_check
      _
    $region19: #{mlp_forward.1} parent=1 // pred_check_branch
      %292 = sbr.rel (0) target = $region21
    $region20: #{mlp_forward.1} parent=1 // pred_region
      _
    $region21: #{mlp_forward.1} parent=1 // pred_fallthru
      _
    %293 = vsyncpa [#allocation3], 1

</llo_original>
